<compile_context>
chip_gen: v5e
topology: v5e:2x2
jax: 0.10.0
libtpu: 0.0.40
codegen_flags: <defaults>
</compile_context>

<pallas_src>
import jax
import jax.numpy as jnp
from jax.experimental import pallas as pl
from jax.experimental.pallas import tpu as pltpu


N_ACTION = 3
SUBLANE = 8            # f32 sublane count
NO_GRID_MAX_ROWS = 4096   # whole-array VMEM path below this (few MiB of VMEM)
MAX_BLOCK_ROWS = 2048     # grid-path tile rows (>=512 rows ~ HBM roofline)


def _round_up(x, m):
    return (x + m - 1) // m * m


def controller_kernel(z_ref, h_ref, p_ref, o_ref):
    """o = tanh(z @ Wz + h @ Wh + b), written at exact n_action lane width.

    z_ref: (Bb, dz)         h_ref: (Bb, dh)
    p_ref: (rows_pad, n_action) packed [Wz ; Wh ; b ; zero rows]
    o_ref: (Bb, n_action)
    """
    dz = z_ref.shape[1]
    dh = h_ref.shape[1]
    wz = p_ref[0:dz, :]                      # (dz, n_action)  static slice
    wh = p_ref[dz:dz + dh, :]                # (dh, n_action)
    b = p_ref[dz + dh:dz + dh + 1, :]        # (1, n_action)   bias row
    acc = jnp.dot(z_ref[...], wz, preferred_element_type=jnp.float32)
    acc = acc + jnp.dot(h_ref[...], wh, preferred_element_type=jnp.float32)
    o_ref[...] = jnp.tanh(acc + b).astype(o_ref.dtype)


def pack_controller_params(weight, bias):
    """One-time prep (outside the hot path).

    weight: (n_action, dz+dh)   bias: (n_action,)   [nn.Linear layout]
    Returns a single (round8(dz+dh+1), n_action) f32 buffer [W^T ; bias-row].
    """
    n_action, k = weight.shape
    rows = _round_up(k + 1, SUBLANE)
    p = jnp.zeros((rows, n_action), jnp.float32)
    p = p.at[:k, :].set(jnp.asarray(weight, jnp.float32).T)
    p = p.at[k, :].set(jnp.asarray(bias, jnp.float32))
    return p


def controller_forward(z, h, packed_params):
    """z: (B, dz), h: (B, dh), packed_params from pack_controller_params."""
    B, dz = z.shape
    dh = h.shape[1]
    rows, n_act = packed_params.shape

    out_shape = jax.ShapeDtypeStruct((B, n_act), jnp.float32)

    if B <= NO_GRID_MAX_ROWS:
        # One-shot kernel: whole (small) arrays resident in VMEM, no grid,
        # no pads, no wrapper-side slice.
        return pl.pallas_call(
            controller_kernel,
            out_shape=out_shape,
            in_specs=[
                pl.BlockSpec(memory_space=pltpu.MemorySpace.VMEM),
                pl.BlockSpec(memory_space=pltpu.MemorySpace.VMEM),
                pl.BlockSpec(memory_space=pltpu.MemorySpace.VMEM),
            ],
            out_specs=pl.BlockSpec(memory_space=pltpu.MemorySpace.VMEM),
        )(z, h, packed_params)

    # Large stacked batch (envs/timesteps): HBM-bound; shard batch blocks
    # across TensorCores. Keep the block count >= 2 and even for v7x's 2 TCs.
    n_blocks = pl.cdiv(B, MAX_BLOCK_ROWS)
    n_blocks = max(2, n_blocks + (n_blocks & 1))          # even, >= 2
    block_b = _round_up(pl.cdiv(B, n_blocks), SUBLANE)
    grid = (pl.cdiv(B, block_b),)                         # ragged last block OK
    return pl.pallas_call(
        controller_kernel,
        out_shape=out_shape,
        grid=grid,
        in_specs=[
            pl.BlockSpec((block_b, dz), lambda i: (i, 0)),
            pl.BlockSpec((block_b, dh), lambda i: (i, 0)),
            pl.BlockSpec((rows, n_act), lambda i: (0, 0)),
        ],
        out_specs=pl.BlockSpec((block_b, n_act), lambda i: (i, 0)),
        compiler_params=pltpu.CompilerParams(
            dimension_semantics=("parallel",)),
    )(z, h, packed_params)


if __name__ == "__main__":
    # Shapes consistent with the module: latent_dim=32, hidden_dim=32, batch=2.
    latent_dim = 32
    hidden_dim = 32
    batch = 2

    key = jax.random.PRNGKey(0)
    kz, kh, kw, kb = jax.random.split(key, 4)

    z = jax.random.normal(kz, (batch, latent_dim), dtype=jnp.float32)
    h = jax.random.normal(kh, (batch, hidden_dim), dtype=jnp.float32)

    # Synthetic parameters with nn.Linear(dz+dh, 3) shapes.
    weight = jax.random.normal(
        kw, (N_ACTION, latent_dim + hidden_dim), dtype=jnp.float32) * 0.1
    bias = jax.random.normal(kb, (N_ACTION,), dtype=jnp.float32) * 0.1

    packed = pack_controller_params(weight, bias)   # one-time param prep
    fwd = jax.jit(controller_forward)

    # Small-batch (grid-less, no-pad) path.
    out = jax.block_until_ready(fwd(z, h, packed))
    ref = jnp.tanh(jnp.concatenate([z, h], axis=-1) @ weight.T + bias)
    assert out.shape == (batch, N_ACTION)
    assert jnp.allclose(out, ref, atol=1e-5, rtol=1e-5)

    # Large-batch path, exercising the parallel-grid (megacore) route.
    big_b = 16384
    kz2, kh2 = jax.random.split(jax.random.PRNGKey(1), 2)
    z_big = jax.random.normal(kz2, (big_b, latent_dim), dtype=jnp.float32)
    h_big = jax.random.normal(kh2, (big_b, hidden_dim), dtype=jnp.float32)
    out_big = jax.block_until_ready(fwd(z_big, h_big, packed))
    ref_big = jnp.tanh(
        jnp.concatenate([z_big, h_big], axis=-1) @ weight.T + bias)
    assert out_big.shape == (big_b, N_ACTION)
    assert jnp.allclose(out_big, ref_big, atol=1e-5, rtol=1e-5)

    print("KERNEL_OK")
</pallas_src>

<mosaic_0001>
module attributes {stable_mosaic.version = 11 : i64} {
  func.func @controller_kernel(%arg0: memref<2x32xf32, #tpu.memory_space<vmem>>, %arg1: memref<2x32xf32, #tpu.memory_space<vmem>>, %arg2: memref<72x3xf32, #tpu.memory_space<vmem>>, %arg3: memref<2x3xf32, #tpu.memory_space<vmem>>) attributes {dimension_semantics = [], scalar_prefetch = 0 : i64, scratch_operands = 0 : i64, tpu.core_type = #tpu.core_type<tc>} {
    %c0 = arith.constant 0 : index
    %c0_0 = arith.constant 0 : index
    %0 = vector.load %arg2[%c0, %c0_0] : memref<72x3xf32, #tpu.memory_space<vmem>>, vector<32x3xf32>
    %c32 = arith.constant 32 : index
    %c0_1 = arith.constant 0 : index
    %1 = vector.load %arg2[%c32, %c0_1] : memref<72x3xf32, #tpu.memory_space<vmem>>, vector<32x3xf32>
    %c64 = arith.constant 64 : index
    %c0_2 = arith.constant 0 : index
    %2 = vector.load %arg2[%c64, %c0_2] : memref<72x3xf32, #tpu.memory_space<vmem>>, vector<1x3xf32>
    %c0_3 = arith.constant 0 : index
    %c0_4 = arith.constant 0 : index
    %3 = vector.load %arg0[%c0_3, %c0_4] : memref<2x32xf32, #tpu.memory_space<vmem>>, vector<2x32xf32>
    %cst = arith.constant dense<0.000000e+00> : vector<2x3xf32>
    %4 = tpu.matmul %3, %0, %cst {dimension_numbers = #tpu.dot_dimension_numbers<[1], [0], [0], [1], [0, 0, 1, 1], [], []>} : vector<2x32xf32>, vector<32x3xf32>, vector<2x3xf32> -> vector<2x3xf32>
    %c0_5 = arith.constant 0 : index
    %c0_6 = arith.constant 0 : index
    %5 = vector.load %arg1[%c0_5, %c0_6] : memref<2x32xf32, #tpu.memory_space<vmem>>, vector<2x32xf32>
    %cst_7 = arith.constant dense<0.000000e+00> : vector<2x3xf32>
    %6 = tpu.matmul %5, %1, %cst_7 {dimension_numbers = #tpu.dot_dimension_numbers<[1], [0], [0], [1], [0, 0, 1, 1], [], []>} : vector<2x32xf32>, vector<32x3xf32>, vector<2x3xf32> -> vector<2x3xf32>
    %7 = arith.addf %4, %6 : vector<2x3xf32>
    %8 = vector.broadcast %2 : vector<1x3xf32> to vector<2x3xf32>
    %9 = arith.addf %7, %8 : vector<2x3xf32>
    %10 = math.tanh %9 : vector<2x3xf32>
    %c0_8 = arith.constant 0 : index
    %c0_9 = arith.constant 0 : index
    %11 = vector.load %arg3[%c0_8, %c0_9] : memref<2x3xf32, #tpu.memory_space<vmem>>, vector<2x3xf32>
    tpu.vector_store %arg3[%c0_8, %c0_9], %10 {strides = array<i32>} : memref<2x3xf32, #tpu.memory_space<vmem>>, vector<2x3xf32>,
    return
  }
}

</mosaic_0001>

<llo_original>
// kernel: controller_forward.1
$region0: #{controller_forward.1}
  #allocation0 [shape = 'u32[]', space=smem, size = 0x4, offset = 0x4, fixed_abs, tag = 'smem constant byte address 0x4 - core index']
  #allocation1 [shape = 'u32[72,128]{1,0:T(1,128)}', space=vmem, size = 0x9000, scoped, tag = 'internal scratch']
  %s0 = inlined_call_operand.vmem [shape: f32[2,32], index: 0, kind: input, shape index: {}]
  %s1 = inlined_call_operand.vmem [shape: f32[2,32], index: 1, kind: input, shape index: {}]
  %s2 = inlined_call_operand.vmem [shape: f32[72,3], index: 2, kind: input, shape index: {}]
  %s3 = inlined_call_operand.hbm [shape: f32[2,3], index: 3, kind: output, shape index: {}]
  %s4 = sld [smem:[#allocation0]]
  $region22: #{controller_forward.1} parent=0
    _
  %s6 = ssub.s32 1, %s4
  %s7 = scalar_select 0, %s6, %s4
  $region1: #{controller_forward.1} parent=0
    #allocation2 [shape = 'u8[1024]{0}', space=vmem, size = 0x400, scoped, tag = 'output window, operand 0, single buffered']
    #allocation3 [shape = 's32[1]{0}', space=sflag, size = 0x4, scoped, tag = 'scoped memory for controller_forward.1']
    %8 = vsyncpa [#allocation3], 0
    // Predicated region
    $region2: #{controller_forward.1} parent=1 // pred_check
      _
    $region3: #{controller_forward.1} parent=1 // pred_check_branch
      %10 = sbr.rel (0) target = $region5
    $region4: #{controller_forward.1} parent=1 // pred_region
      _
    $region5: #{controller_forward.1} parent=1 // pred_fallthru
      _
    // Predicated region
    $region6: #{controller_forward.1} parent=1 // pred_check
      _
    $region7: #{controller_forward.1} parent=1 // pred_check_branch
      %12 = sbr.rel (0) target = $region9
    $region8: #{controller_forward.1} parent=1 // pred_region
      _
    $region9: #{controller_forward.1} parent=1 // pred_fallthru
      _
    // Predicated region
    $region10: #{controller_forward.1} parent=1 // pred_check
      _
    $region11: #{controller_forward.1} parent=1 // pred_check_branch
      %14 = sbr.rel (0) target = $region13
    $region12: #{controller_forward.1} parent=1 // pred_region
      _
    $region13: #{controller_forward.1} parent=1 // pred_fallthru
      _
    %v15 = vld [vmem:[%s2] sm:$0xff]
    %v16 = vld [vmem:[%s2 + $0x8] sm:$0xff]
    %v17 = vld [vmem:[%s2 + $0x10] sm:$0xff]
    %v18 = vld [vmem:[%s2 + $0x18] sm:$0xff]
    %v19 = vld [vmem:[%s2 + $0x20] sm:$0xff]
    %v20 = vld [vmem:[%s2 + $0x28] sm:$0xff]
    %v21 = vld [vmem:[%s2 + $0x30] sm:$0xff]
    %v22 = vld [vmem:[%s2 + $0x38] sm:$0xff]
    %v23 = vld [vmem:[%s2 + $0x40] sm:$0x1]
    %v24 = vld [vmem:[%s0] sm:$0x3]
    %v25 = vld [vmem:[%s1] sm:$0x3]
    %vm26 = vcmask 261120
    %v28 = vsel %vm26, %v25, 0
    %30 = vmatpush.msra.mxu0 0.0
    %31 = vmatpush.msra.mxu0 0.0
    %32 = vmatpush.msra.mxu0 0.0
    %33 = vmatpush.msra.mxu0 0.0
    %34 = vmatpush.msra.mxu0 0.0
    %35 = vmatpush.msra.mxu0 0.0
    %36 = vmatpush.msra.mxu0 0.0
    %37 = vmatpush.msra.mxu0 0.0
    %38 = vmatpush.msra.mxu0 0.0
    %39 = vmatpush.msra.mxu0 0.0
    %40 = vmatpush.msra.mxu0 0.0
    %41 = vmatpush.msra.mxu0 0.0
    %42 = vmatpush.msra.mxu0 %v22
    %43 = vmatpush.msra.mxu0 %v21
    %44 = vmatpush.msra.mxu0 %v20
    %45 = vmatpush.msra.mxu0 %v19
    %46 = vmatmul.f32.gmra.mxu0 %v28
    %v47 = vpop.f32.mrf.mxu0
    %v48 = vadd.f32 0.0, %v47
    %49 = vdwg.mxu0
    %v51 = vsel %vm26, %v24, 0
    %53 = vmatpush.msra.mxu0 0.0
    %54 = vmatpush.msra.mxu0 0.0
    %55 = vmatpush.msra.mxu0 0.0
    %56 = vmatpush.msra.mxu0 0.0
    %57 = vmatpush.msra.mxu0 0.0
    %58 = vmatpush.msra.mxu0 0.0
    %59 = vmatpush.msra.mxu0 0.0
    %60 = vmatpush.msra.mxu0 0.0
    %61 = vmatpush.msra.mxu0 0.0
    %62 = vmatpush.msra.mxu0 0.0
    %63 = vmatpush.msra.mxu0 0.0
    %64 = vmatpush.msra.mxu0 0.0
    %65 = vmatpush.msra.mxu0 %v18
    %66 = vmatpush.msra.mxu0 %v17
    %67 = vmatpush.msra.mxu0 %v16
    %68 = vmatpush.msra.mxu0 %v15
    %69 = vmatmul.f32.gmra.mxu0 %v51
    %v70 = vpop.f32.mrf.mxu0
    %v71 = vadd.f32 %v48, %v70
    %72 = vdwg.mxu0
    %v73 = vperm.slane %v23, 0
    %v74 = vadd.f32 %v71, %v73
    %v75 = vtanh.pop %v74
    %vm76 = vcmask 17408
    %77 = vst.msk [vmem:[#allocation2] sm:$0x3] %vm76, %v75
    // Predicated region
    $region14: #{controller_forward.1} parent=1 // pred_check
      _
    $region15: #{controller_forward.1} parent=1 // pred_check_branch
      %79 = sbr.rel (0) target = $region17
    $region16: #{controller_forward.1} parent=1 // pred_region
      %81 = vsyncadd [#allocation3], 0
      %s83 = sshll.u32 [#allocation2], 4
      %s84 = int_to_ptr.vmem [resolvable:$true] %s83
      %s85 = sshll.u32 %s3, 4
      %s86 = int_to_ptr.hbm [resolvable:$true] %s85
      %88 = dma.vmem_to_hbm [thread:$0]  %s84, 32, %s86, [#allocation3]
    $region17: #{controller_forward.1} parent=1 // pred_fallthru
      _
    // Predicated region
    $region18: #{controller_forward.1} parent=1 // pred_check
      _
    $region19: #{controller_forward.1} parent=1 // pred_check_branch
      %90 = sbr.rel (0) target = $region21
    $region20: #{controller_forward.1} parent=1 // pred_region
      %92 = dma.done [#allocation3], 32
    $region21: #{controller_forward.1} parent=1 // pred_fallthru
      _
    %93 = vsyncpa [#allocation3], 1

</llo_original>
